<compile_context>
chip_gen: v6e
topology: v6e:2x2x1
jax: 0.10.0
libtpu: 0.0.40
codegen_flags: <defaults>
</compile_context>

<pallas_src>
import jax
import jax.numpy as jnp
from jax.experimental import pallas as pl
from jax.experimental.pallas import tpu as pltpu


# ----------------------------- Pallas kernel ------------------------------
def dhnn_kernel(x_ref, w1_ref, b1_ref, w2f_ref, w2b_ref, b2_ref, w3_ref,
                woutT_ref, out_ref):
    cdt = w1_ref.dtype          # compute dtype: f32 (default) or bf16 (v6e/v7x)
    f32 = jnp.float32

    # Row-layout input tile -> lane-dense column layout via an in-kernel panel
    # transpose (XLU).  This replaces the wrapper-side full-array transposes
    # that tripled HBM traffic.
    xT = x_ref[...].astype(cdt).T                                     # (Din, tb)

    # Fused forward of both MLPs; hidden axis is [D-mlp | H-mlp] = 2H.
    z1 = jnp.dot(w1_ref[...], xT, preferred_element_type=f32) + b1_ref[...]
    h1 = jnp.tanh(z1.astype(cdt))                                     # (2H, tb)
    z2 = jnp.dot(w2f_ref[...], h1, preferred_element_type=f32) + b2_ref[...]
    t2 = jnp.tanh(z2.astype(cdt))                                     # (2H, tb)

    # Analytic gradient of sum(y) w.r.t. x (column layout):
    #   g1 = w3 + W2^T (w3 * (1 - t2^2));  u = g1 * (1 - h1^2)
    w3 = w3_ref[...]                                                  # (2H, 1)
    s2 = (w3 * (1.0 - t2 * t2)).astype(cdt)                           # (2H, tb)
    g1 = w3.astype(f32) + jnp.dot(w2b_ref[...], s2,
                                  preferred_element_type=f32)         # (2H, tb)
    u = (g1 * (1.0 - h1 * h1).astype(f32)).astype(cdt)                # (2H, tb)

    # WoutT = [W1d^T | W1h_rot^T] folds irr + symplectic rot into one matmul.
    outT = jnp.dot(woutT_ref[...], u, preferred_element_type=f32)     # (Din, tb)
    out_ref[...] = outT.T.astype(out_ref.dtype)                       # (tb, Din)


# ------------------------------ host helpers ------------------------------
def make_mlp_params(key, input_dim, hidden_dim, output_dim):
    """Deterministic init mirroring nn.Linear default (uniform +/- 1/sqrt(fan_in))."""
    ks = jax.random.split(key, 6)

    def lin(kw, kb, fan_in, fan_out):
        bound = 1.0 / jnp.sqrt(fan_in)
        W = jax.random.uniform(kw, (fan_out, fan_in), jnp.float32, -bound, bound)
        b = jax.random.uniform(kb, (fan_out,), jnp.float32, -bound, bound)
        return W, b

    W1, b1 = lin(ks[0], ks[1], input_dim, hidden_dim)
    W2, b2 = lin(ks[2], ks[3], hidden_dim, hidden_dim)
    W3, b3 = lin(ks[4], ks[5], hidden_dim, output_dim)
    return (W1, b1, W2, b2, W3, b3)


def _prep_weights(params_d, params_h, input_dim, compute_dtype):
    """Pack both MLPs into fused, kernel-ready (column-layout) weights."""
    W1d, b1d, W2d, b2d, W3d, _ = params_d
    W1h, b1h, W2h, b2h, W3h, _ = params_h
    H = W1d.shape[0]
    n = input_dim // 2

    W1_all = jnp.concatenate([W1d, W1h], axis=0)                      # (2H, Din)
    b1_all = jnp.concatenate([b1d, b1h]).reshape(2 * H, 1)            # (2H, 1)

    # Block-diagonal fusion of the second layers.  Free while H << 128 (zero
    # blocks are MXU padding); split back into two (H,H) matmuls if H >= 128.
    Z = jnp.zeros((H, H), W2d.dtype)
    W2f = jnp.concatenate([jnp.concatenate([W2d, Z], axis=1),
                           jnp.concatenate([Z, W2h], axis=1)], axis=0)  # (2H, 2H)
    W2b = W2f.T                                                       # block-diag(W2^T)
    b2_all = jnp.concatenate([b2d, b2h]).reshape(2 * H, 1)            # (2H, 1)
    w3_all = jnp.concatenate([W3d[0], W3h[0]]).reshape(2 * H, 1)      # (2H, 1)

    # Fold the symplectic permutation/negation into the output weight.
    W1h_rot = jnp.concatenate([W1h[:, n:], -W1h[:, :n]], axis=1)      # (H, Din)
    WoutT = jnp.concatenate([W1d, W1h_rot], axis=0).T                 # (Din, 2H)

    ws = (W1_all, b1_all, W2f, W2b, b2_all, w3_all, WoutT)
    return tuple(w.astype(compute_dtype) for w in ws)


def _pick_batch_tile(n, batch_tile):
    """Pick a lane-aligned batch tile that divides n; prefer >=2 grid steps (v7x)."""
    if n <= 128 or n % 128 != 0:
        return n                                    # single full block
    tb = max(128, (min(batch_tile, n) // 128) * 128)
    while n % tb != 0:
        tb -= 128
    if n // tb < 2:                                 # v7x: keep both TCs busy
        half = ((n // 2) // 128) * 128
        while half >= 128 and n % half != 0:
            half -= 128
        if half >= 128:
            tb = half
    return tb


def dhnn_sat_forward(x, params_d, params_h, *, batch_tile=2048,
                     compute_dtype=jnp.float32):
    N, Din = x.shape
    assert Din % 2 == 0, "input_dim must be even (q/p split)"

    weights = _prep_weights(params_d, params_h, Din, compute_dtype)

    # Pad the batch to a lane multiple so every tile is lane-dense; the padded
    # rows are sliced off after the call.
    n_pad = (pl.cdiv(N, 128) * 128) if N >= 128 else N
    x_in = jnp.pad(x, ((0, n_pad - N), (0, 0))) if n_pad != N else x

    tb = _pick_batch_tile(n_pad, batch_tile)
    grid = (n_pad // tb,)

    # VMEM estimate; only raise the scoped limit when a very large tile would
    # exceed the default (relevant mostly for v5e's 16 MiB default).
    H2 = weights[0].shape[0]                                  # 2 * hidden_dim
    wbytes = sum(int(w.size) * w.dtype.itemsize for w in weights)
    io_bytes = 2 * 2 * tb * Din * x.dtype.itemsize            # dbl-buffered x/out tiles
    inter_bytes = (6 * H2 + 2 * Din) * tb * 4                 # intermediates + panels
    vmem_est = io_bytes + 2 * wbytes + inter_bytes
    cp_kwargs = dict(dimension_semantics=("parallel",))
    if vmem_est > (12 << 20):
        cp_kwargs["vmem_limit_bytes"] = int(min(2 * vmem_est, 64 << 20))

    out = pl.pallas_call(
        dhnn_kernel,
        out_shape=jax.ShapeDtypeStruct((n_pad, Din), x.dtype),
        grid=grid,
        in_specs=[pl.BlockSpec((tb, Din), lambda i: (i, 0))]
                 + [pl.BlockSpec(w.shape, lambda i: (0, 0)) for w in weights],
        out_specs=pl.BlockSpec((tb, Din), lambda i: (i, 0)),
        compiler_params=pltpu.CompilerParams(**cp_kwargs),
    )(x_in, *weights)

    return out[:N] if n_pad != N else out


# ---------------- pure-JAX reference (autodiff) for validation ----------------
def mlp_apply(params, x):
    W1, b1, W2, b2, W3, b3 = params
    h = jnp.tanh(x @ W1.T + b1)
    h = h + jnp.tanh(h @ W2.T + b2)
    return h @ W3.T + b3


def ref_forward(x, params_d, params_h):
    gD = jax.grad(lambda xx: mlp_apply(params_d, xx).sum())(x)
    gH = jax.grad(lambda xx: mlp_apply(params_h, xx).sum())(x)
    n = x.shape[-1] // 2
    dHdq, dHdp = gH[:, :n], gH[:, n:]
    rot = jnp.concatenate([dHdp, -dHdq], axis=-1)
    return gD + rot


if __name__ == "__main__":
    input_dim = 16      # must be even (q/p split)
    hidden_dim = 32
    batch = 256         # small demo; tile picker -> 2 steps of 128 (both v7x TCs)

    root = jax.random.PRNGKey(0)
    kx, kd, kh = jax.random.split(root, 3)
    x = jax.random.normal(kx, (batch, input_dim), jnp.float32)

    params_d = make_mlp_params(kd, input_dim, hidden_dim, 1)
    params_h = make_mlp_params(kh, input_dim, hidden_dim, 1)

    # f32 compute keeps the validation tight; pass compute_dtype=jnp.bfloat16
    # on v6e/v7x for the mem/EUP-bound win (loosen tolerances accordingly).
    out = dhnn_sat_forward(x, params_d, params_h, batch_tile=2048)
    out = jax.block_until_ready(out)

    ref = jax.block_until_ready(ref_forward(x, params_d, params_h))
    assert out.shape == (batch, input_dim)
    err = jnp.max(jnp.abs(out - ref))
    assert jnp.allclose(out, ref, rtol=1e-3, atol=1e-3), f"max abs err {err}"

    print("KERNEL_OK")
</pallas_src>

<mosaic_0001>
module attributes {stable_mosaic.version = 11 : i64} {
  func.func @dhnn_kernel(%arg0: i32, %arg1: memref<128x16xf32, #tpu.memory_space<vmem>>, %arg2: memref<64x16xf32, #tpu.memory_space<vmem>>, %arg3: memref<64x1xf32, #tpu.memory_space<vmem>>, %arg4: memref<64x64xf32, #tpu.memory_space<vmem>>, %arg5: memref<64x64xf32, #tpu.memory_space<vmem>>, %arg6: memref<64x1xf32, #tpu.memory_space<vmem>>, %arg7: memref<64x1xf32, #tpu.memory_space<vmem>>, %arg8: memref<16x64xf32, #tpu.memory_space<vmem>>, %arg9: memref<128x16xf32, #tpu.memory_space<vmem>>) attributes {dimension_semantics = [#tpu.dimension_semantics<parallel>], iteration_bounds = array<i64: 2>, scalar_prefetch = 0 : i64, scratch_operands = 0 : i64, tpu.core_type = #tpu.core_type<tc>, window_params = [{transform_indices = @transform_0, window_bounds = array<i64: 128, 16>}, {pipeline_mode = #tpu.pipeline_mode<synchronous>, transform_indices = @transform_1, window_bounds = array<i64: 64, 16>}, {pipeline_mode = #tpu.pipeline_mode<synchronous>, transform_indices = @transform_2, window_bounds = array<i64: 64, 1>}, {pipeline_mode = #tpu.pipeline_mode<synchronous>, transform_indices = @transform_3, window_bounds = array<i64: 64, 64>}, {pipeline_mode = #tpu.pipeline_mode<synchronous>, transform_indices = @transform_4, window_bounds = array<i64: 64, 64>}, {pipeline_mode = #tpu.pipeline_mode<synchronous>, transform_indices = @transform_5, window_bounds = array<i64: 64, 1>}, {pipeline_mode = #tpu.pipeline_mode<synchronous>, transform_indices = @transform_6, window_bounds = array<i64: 64, 1>}, {pipeline_mode = #tpu.pipeline_mode<synchronous>, transform_indices = @transform_7, window_bounds = array<i64: 16, 64>}, {transform_indices = @transform_8, window_bounds = array<i64: 128, 16>}]} {
    %c0 = arith.constant 0 : index
    %c0_0 = arith.constant 0 : index
    %0 = vector.load %arg1[%c0, %c0_0] : memref<128x16xf32, #tpu.memory_space<vmem>>, vector<128x16xf32>
    %1 = tpu.transpose %0, [1, 0] : vector<128x16xf32> -> vector<16x128xf32>
    %c0_1 = arith.constant 0 : index
    %c0_2 = arith.constant 0 : index
    %2 = vector.load %arg2[%c0_1, %c0_2] : memref<64x16xf32, #tpu.memory_space<vmem>>, vector<64x16xf32>
    %cst = arith.constant dense<0.000000e+00> : vector<64x128xf32>
    %3 = tpu.matmul %2, %1, %cst {dimension_numbers = #tpu.dot_dimension_numbers<[1], [0], [0], [1], [0, 0, 1, 1], [], []>} : vector<64x16xf32>, vector<16x128xf32>, vector<64x128xf32> -> vector<64x128xf32>
    %c0_3 = arith.constant 0 : index
    %c0_4 = arith.constant 0 : index
    %4 = vector.load %arg3[%c0_3, %c0_4] : memref<64x1xf32, #tpu.memory_space<vmem>>, vector<64x1xf32>
    %5 = vector.broadcast %4 : vector<64x1xf32> to vector<64x128xf32>
    %6 = arith.addf %3, %5 : vector<64x128xf32>
    %7 = math.tanh %6 : vector<64x128xf32>
    %c0_5 = arith.constant 0 : index
    %c0_6 = arith.constant 0 : index
    %8 = vector.load %arg4[%c0_5, %c0_6] : memref<64x64xf32, #tpu.memory_space<vmem>>, vector<64x64xf32>
    %cst_7 = arith.constant dense<0.000000e+00> : vector<64x128xf32>
    %9 = tpu.matmul %8, %7, %cst_7 {dimension_numbers = #tpu.dot_dimension_numbers<[1], [0], [0], [1], [0, 0, 1, 1], [], []>} : vector<64x64xf32>, vector<64x128xf32>, vector<64x128xf32> -> vector<64x128xf32>
    %c0_8 = arith.constant 0 : index
    %c0_9 = arith.constant 0 : index
    %10 = vector.load %arg6[%c0_8, %c0_9] : memref<64x1xf32, #tpu.memory_space<vmem>>, vector<64x1xf32>
    %11 = vector.broadcast %10 : vector<64x1xf32> to vector<64x128xf32>
    %12 = arith.addf %9, %11 : vector<64x128xf32>
    %13 = math.tanh %12 : vector<64x128xf32>
    %c0_10 = arith.constant 0 : index
    %c0_11 = arith.constant 0 : index
    %14 = vector.load %arg7[%c0_10, %c0_11] : memref<64x1xf32, #tpu.memory_space<vmem>>, vector<64x1xf32>
    %15 = arith.mulf %13, %13 : vector<64x128xf32>
    %cst_12 = arith.constant 1.000000e+00 : f32
    %16 = vector.broadcast %cst_12 : f32 to vector<64x128xf32>
    %17 = arith.subf %16, %15 : vector<64x128xf32>
    %18 = vector.broadcast %14 : vector<64x1xf32> to vector<64x128xf32>
    %19 = arith.mulf %18, %17 : vector<64x128xf32>
    %c0_13 = arith.constant 0 : index
    %c0_14 = arith.constant 0 : index
    %20 = vector.load %arg5[%c0_13, %c0_14] : memref<64x64xf32, #tpu.memory_space<vmem>>, vector<64x64xf32>
    %cst_15 = arith.constant dense<0.000000e+00> : vector<64x128xf32>
    %21 = tpu.matmul %20, %19, %cst_15 {dimension_numbers = #tpu.dot_dimension_numbers<[1], [0], [0], [1], [0, 0, 1, 1], [], []>} : vector<64x64xf32>, vector<64x128xf32>, vector<64x128xf32> -> vector<64x128xf32>
    %22 = vector.broadcast %14 : vector<64x1xf32> to vector<64x128xf32>
    %23 = arith.addf %22, %21 : vector<64x128xf32>
    %24 = arith.mulf %7, %7 : vector<64x128xf32>
    %cst_16 = arith.constant 1.000000e+00 : f32
    %25 = vector.broadcast %cst_16 : f32 to vector<64x128xf32>
    %26 = arith.subf %25, %24 : vector<64x128xf32>
    %27 = arith.mulf %23, %26 : vector<64x128xf32>
    %c0_17 = arith.constant 0 : index
    %c0_18 = arith.constant 0 : index
    %28 = vector.load %arg8[%c0_17, %c0_18] : memref<16x64xf32, #tpu.memory_space<vmem>>, vector<16x64xf32>
    %cst_19 = arith.constant dense<0.000000e+00> : vector<16x128xf32>
    %29 = tpu.matmul %28, %27, %cst_19 {dimension_numbers = #tpu.dot_dimension_numbers<[1], [0], [0], [1], [0, 0, 1, 1], [], []>} : vector<16x64xf32>, vector<64x128xf32>, vector<16x128xf32> -> vector<16x128xf32>
    %30 = tpu.transpose %29, [1, 0] : vector<16x128xf32> -> vector<128x16xf32>
    %c0_20 = arith.constant 0 : index
    %c0_21 = arith.constant 0 : index
    %31 = vector.load %arg9[%c0_20, %c0_21] : memref<128x16xf32, #tpu.memory_space<vmem>>, vector<128x16xf32>
    tpu.vector_store %arg9[%c0_20, %c0_21], %30 {strides = array<i32>} : memref<128x16xf32, #tpu.memory_space<vmem>>, vector<128x16xf32>,
    return
  }
  func.func @transform_0(%arg0: i32) -> (i32, i32) {
    %c0_i32 = arith.constant 0 : i32
    %c0_i32_0 = arith.constant 0 : i32
    return %arg0, %c0_i32 : i32, i32
  }
  func.func @transform_1(%arg0: i32) -> (i32, i32) {
    %c0_i32 = arith.constant 0 : i32
    %c0_i32_0 = arith.constant 0 : i32
    %c0_i32_1 = arith.constant 0 : i32
    return %c0_i32, %c0_i32_0 : i32, i32
  }
  func.func @transform_2(%arg0: i32) -> (i32, i32) {
    %c0_i32 = arith.constant 0 : i32
    %c0_i32_0 = arith.constant 0 : i32
    %c0_i32_1 = arith.constant 0 : i32
    return %c0_i32, %c0_i32_0 : i32, i32
  }
  func.func @transform_3(%arg0: i32) -> (i32, i32) {
    %c0_i32 = arith.constant 0 : i32
    %c0_i32_0 = arith.constant 0 : i32
    %c0_i32_1 = arith.constant 0 : i32
    return %c0_i32, %c0_i32_0 : i32, i32
  }
  func.func @transform_4(%arg0: i32) -> (i32, i32) {
    %c0_i32 = arith.constant 0 : i32
    %c0_i32_0 = arith.constant 0 : i32
    %c0_i32_1 = arith.constant 0 : i32
    return %c0_i32, %c0_i32_0 : i32, i32
  }
  func.func @transform_5(%arg0: i32) -> (i32, i32) {
    %c0_i32 = arith.constant 0 : i32
    %c0_i32_0 = arith.constant 0 : i32
    %c0_i32_1 = arith.constant 0 : i32
    return %c0_i32, %c0_i32_0 : i32, i32
  }
  func.func @transform_6(%arg0: i32) -> (i32, i32) {
    %c0_i32 = arith.constant 0 : i32
    %c0_i32_0 = arith.constant 0 : i32
    %c0_i32_1 = arith.constant 0 : i32
    return %c0_i32, %c0_i32_0 : i32, i32
  }
  func.func @transform_7(%arg0: i32) -> (i32, i32) {
    %c0_i32 = arith.constant 0 : i32
    %c0_i32_0 = arith.constant 0 : i32
    %c0_i32_1 = arith.constant 0 : i32
    return %c0_i32, %c0_i32_0 : i32, i32
  }
  func.func @transform_8(%arg0: i32) -> (i32, i32) {
    %c0_i32 = arith.constant 0 : i32
    %c0_i32_0 = arith.constant 0 : i32
    return %arg0, %c0_i32 : i32, i32
  }
}

</mosaic_0001>

<llo_original>
// kernel: tpu_custom_call.1
$region0: #{tpu_custom_call.1}
  #allocation0 [shape = 'u32[]', space=smem, size = 0x4, offset = 0x4, fixed_abs, tag = 'smem constant byte address 0x4 - core index']
  #allocation1 [shape = 'u32[144,128]{1,0:T(1,128)}', space=vmem, size = 0x12000, scoped, tag = 'internal scratch']
  %s0 = inlined_call_operand.vmem [shape: f32[256,16], index: 0, kind: input, shape index: {}]
  %s1 = inlined_call_operand.vmem [shape: f32[64,16], index: 1, kind: input, shape index: {}]
  %s2 = inlined_call_operand.vmem [shape: f32[64,1], index: 2, kind: input, shape index: {}]
  %s3 = inlined_call_operand.vmem [shape: f32[64,64], index: 3, kind: input, shape index: {}]
  %s4 = inlined_call_operand.vmem [shape: f32[64,64], index: 4, kind: input, shape index: {}]
  %s5 = inlined_call_operand.vmem [shape: f32[64,1], index: 5, kind: input, shape index: {}]
  %s6 = inlined_call_operand.vmem [shape: f32[64,1], index: 6, kind: input, shape index: {}]
  %s7 = inlined_call_operand.vmem [shape: f32[16,64], index: 7, kind: input, shape index: {}]
  %s8 = inlined_call_operand.vmem [shape: f32[256,16], index: 8, kind: output, shape index: {}]
  %s9 = sld [smem:[#allocation0]]
  $region65: #{tpu_custom_call.1} parent=0
    _
  %s11 = ssub.s32 1, %s9
  %s12 = scalar_select 0, %s11, %s9
  loop: start=0, step=1, limit=4
  $region2: #{tpu_custom_call.1} parent=0 // loop_pre_header
    _
  $region3: #{tpu_custom_call.1} parent=0 // loop_header
    %s14 = sphi 0, %s18
    %p15 = scmp.ge.s32.totalorder %s14, 4
    %s24 = sphi 0, %s26
    %s27 = sphi 0, %s24
    %s28 = sphi 0, %s27
    %s44 = sphi 0, %s28
    %s48 = sphi 0, %s48
    %s50 = sphi 0, %s48
    %s51 = sphi 0, %s50
    %s65 = sphi 0, %s51
    %s69 = sphi 0, %s69
    %s71 = sphi 0, %s69
    %s72 = sphi 0, %s71
    %s86 = sphi 0, %s72
    %s90 = sphi 0, %s90
    %s92 = sphi 0, %s90
    %s93 = sphi 0, %s92
    %s107 = sphi 0, %s93
    %s111 = sphi 0, %s111
    %s113 = sphi 0, %s111
    %s114 = sphi 0, %s113
    %s128 = sphi 0, %s114
    %s132 = sphi 0, %s132
    %s134 = sphi 0, %s132
    %s135 = sphi 0, %s134
    %s149 = sphi 0, %s135
    %s153 = sphi 0, %s153
    %s155 = sphi 0, %s153
    %s156 = sphi 0, %s155
    %s170 = sphi 0, %s156
    %s174 = sphi 0, %s174
    %s176 = sphi 0, %s174
    %s177 = sphi 0, %s176
    %s191 = sphi 0, %s177
    %s197 = sphi 0, %s199
    %s200 = sphi 0, %s197
    %s201 = sphi 0, %s200
    %s217 = sphi 0, %s201
  $region4: #{tpu_custom_call.1} parent=0 // loop_header_branch
    %17 = sbr.rel (%p15) target = $region8
  $region5: #{tpu_custom_call.1} parent=0 // loop_body
    %s19 = ssub.s32 %s14, 1
    %s20 = ssub.s32 %s14, 2
    %s21 = sadd.s32 %s14, 1
    %s22 = ssub.s32 %s14, %s21
    %p23 = scmp.eq.s32.totalorder %s22, 0
    %s25 = sadd.s32 %s24, 1
    %s26 = scalar_select %p23, %s24, %s25
    %p29 = pneg %p23
    %p30 = scmp.eq.s32.totalorder %s14, 1
    %p31 = por %p29, %p30
    %p32 = scmp.ne.s32.totalorder %s24, %s27
    %p33 = scmp.eq.s32.totalorder %s14, 0
    %p34 = por %p32, %p33
    %p35 = scmp.ne.s32.totalorder %s24, %s27
    %p36 = scmp.eq.s32.totalorder %s19, 1
    %p37 = por %p35, %p36
    %p38 = scmp.ne.s32.totalorder %s27, %s28
    %p39 = scmp.eq.s32.totalorder %s19, 0
    %p40 = por %p38, %p39
    %p41 = scmp.ne.s32.totalorder %s27, %s28
    %p42 = scmp.eq.s32.totalorder %s20, 1
    %p43 = por %p41, %p42
    %p45 = scmp.ne.s32.totalorder %s28, %s44
    %p46 = scmp.eq.s32.totalorder %s20, 0
    %p47 = por %p45, %p46
    %s49 = sadd.s32 %s48, 1
    %p52 = scmp.eq.s32.totalorder %s14, 1
    %p53 = scmp.ne.s32.totalorder %s48, %s50
    %p54 = scmp.eq.s32.totalorder %s14, 0
    %p55 = por %p53, %p54
    %p56 = scmp.ne.s32.totalorder %s48, %s50
    %p57 = scmp.eq.s32.totalorder %s19, 1
    %p58 = por %p56, %p57
    %p59 = scmp.ne.s32.totalorder %s50, %s51
    %p60 = scmp.eq.s32.totalorder %s19, 0
    %p61 = por %p59, %p60
    %p62 = scmp.ne.s32.totalorder %s50, %s51
    %p63 = scmp.eq.s32.totalorder %s20, 1
    %p64 = por %p62, %p63
    %p66 = scmp.ne.s32.totalorder %s51, %s65
    %p67 = scmp.eq.s32.totalorder %s20, 0
    %p68 = por %p66, %p67
    %s70 = sadd.s32 %s69, 1
    %p73 = scmp.eq.s32.totalorder %s14, 1
    %p74 = scmp.ne.s32.totalorder %s69, %s71
    %p75 = scmp.eq.s32.totalorder %s14, 0
    %p76 = por %p74, %p75
    %p77 = scmp.ne.s32.totalorder %s69, %s71
    %p78 = scmp.eq.s32.totalorder %s19, 1
    %p79 = por %p77, %p78
    %p80 = scmp.ne.s32.totalorder %s71, %s72
    %p81 = scmp.eq.s32.totalorder %s19, 0
    %p82 = por %p80, %p81
    %p83 = scmp.ne.s32.totalorder %s71, %s72
    %p84 = scmp.eq.s32.totalorder %s20, 1
    %p85 = por %p83, %p84
    %p87 = scmp.ne.s32.totalorder %s72, %s86
    %p88 = scmp.eq.s32.totalorder %s20, 0
    %p89 = por %p87, %p88
    %s91 = sadd.s32 %s90, 1
    %p94 = scmp.eq.s32.totalorder %s14, 1
    %p95 = scmp.ne.s32.totalorder %s90, %s92
    %p96 = scmp.eq.s32.totalorder %s14, 0
    %p97 = por %p95, %p96
    %p98 = scmp.ne.s32.totalorder %s90, %s92
    %p99 = scmp.eq.s32.totalorder %s19, 1
    %p100 = por %p98, %p99
    %p101 = scmp.ne.s32.totalorder %s92, %s93
    %p102 = scmp.eq.s32.totalorder %s19, 0
    %p103 = por %p101, %p102
    %p104 = scmp.ne.s32.totalorder %s92, %s93
    %p105 = scmp.eq.s32.totalorder %s20, 1
    %p106 = por %p104, %p105
    %p108 = scmp.ne.s32.totalorder %s93, %s107
    %p109 = scmp.eq.s32.totalorder %s20, 0
    %p110 = por %p108, %p109
    %s112 = sadd.s32 %s111, 1
    %p115 = scmp.eq.s32.totalorder %s14, 1
    %p116 = scmp.ne.s32.totalorder %s111, %s113
    %p117 = scmp.eq.s32.totalorder %s14, 0
    %p118 = por %p116, %p117
    %p119 = scmp.ne.s32.totalorder %s111, %s113
    %p120 = scmp.eq.s32.totalorder %s19, 1
    %p121 = por %p119, %p120
    %p122 = scmp.ne.s32.totalorder %s113, %s114
    %p123 = scmp.eq.s32.totalorder %s19, 0
    %p124 = por %p122, %p123
    %p125 = scmp.ne.s32.totalorder %s113, %s114
    %p126 = scmp.eq.s32.totalorder %s20, 1
    %p127 = por %p125, %p126
    %p129 = scmp.ne.s32.totalorder %s114, %s128
    %p130 = scmp.eq.s32.totalorder %s20, 0
    %p131 = por %p129, %p130
    %s133 = sadd.s32 %s132, 1
    %p136 = scmp.eq.s32.totalorder %s14, 1
    %p137 = scmp.ne.s32.totalorder %s132, %s134
    %p138 = scmp.eq.s32.totalorder %s14, 0
    %p139 = por %p137, %p138
    %p140 = scmp.ne.s32.totalorder %s132, %s134
    %p141 = scmp.eq.s32.totalorder %s19, 1
    %p142 = por %p140, %p141
    %p143 = scmp.ne.s32.totalorder %s134, %s135
    %p144 = scmp.eq.s32.totalorder %s19, 0
    %p145 = por %p143, %p144
    %p146 = scmp.ne.s32.totalorder %s134, %s135
    %p147 = scmp.eq.s32.totalorder %s20, 1
    %p148 = por %p146, %p147
    %p150 = scmp.ne.s32.totalorder %s135, %s149
    %p151 = scmp.eq.s32.totalorder %s20, 0
    %p152 = por %p150, %p151
    %s154 = sadd.s32 %s153, 1
    %p157 = scmp.eq.s32.totalorder %s14, 1
    %p158 = scmp.ne.s32.totalorder %s153, %s155
    %p159 = scmp.eq.s32.totalorder %s14, 0
    %p160 = por %p158, %p159
    %p161 = scmp.ne.s32.totalorder %s153, %s155
    %p162 = scmp.eq.s32.totalorder %s19, 1
    %p163 = por %p161, %p162
    %p164 = scmp.ne.s32.totalorder %s155, %s156
    %p165 = scmp.eq.s32.totalorder %s19, 0
    %p166 = por %p164, %p165
    %p167 = scmp.ne.s32.totalorder %s155, %s156
    %p168 = scmp.eq.s32.totalorder %s20, 1
    %p169 = por %p167, %p168
    %p171 = scmp.ne.s32.totalorder %s156, %s170
    %p172 = scmp.eq.s32.totalorder %s20, 0
    %p173 = por %p171, %p172
    %s175 = sadd.s32 %s174, 1
    %p178 = scmp.eq.s32.totalorder %s14, 1
    %p179 = scmp.ne.s32.totalorder %s174, %s176
    %p180 = scmp.eq.s32.totalorder %s14, 0
    %p181 = por %p179, %p180
    %p182 = scmp.ne.s32.totalorder %s174, %s176
    %p183 = scmp.eq.s32.totalorder %s19, 1
    %p184 = por %p182, %p183
    %p185 = scmp.ne.s32.totalorder %s176, %s177
    %p186 = scmp.eq.s32.totalorder %s19, 0
    %p187 = por %p185, %p186
    %p188 = scmp.ne.s32.totalorder %s176, %s177
    %p189 = scmp.eq.s32.totalorder %s20, 1
    %p190 = por %p188, %p189
    %p192 = scmp.ne.s32.totalorder %s177, %s191
    %p193 = scmp.eq.s32.totalorder %s20, 0
    %p194 = por %p192, %p193
    %s195 = ssub.s32 %s14, %s21
    %p196 = scmp.eq.s32.totalorder %s195, 0
    %s198 = sadd.s32 %s197, 1
    %s199 = scalar_select %p196, %s197, %s198
    %p202 = pneg %p196
    %p203 = scmp.eq.s32.totalorder %s14, 1
    %p204 = por %p202, %p203
    %p205 = scmp.ne.s32.totalorder %s197, %s200
    %p206 = scmp.eq.s32.totalorder %s14, 0
    %p207 = por %p205, %p206
    %p208 = scmp.ne.s32.totalorder %s197, %s200
    %p209 = scmp.eq.s32.totalorder %s19, 1
    %p210 = por %p208, %p209
    %p211 = scmp.ne.s32.totalorder %s200, %s201
    %p212 = scmp.eq.s32.totalorder %s19, 0
    %p213 = por %p211, %p212
    %p214 = scmp.ne.s32.totalorder %s200, %s201
    %p215 = scmp.eq.s32.totalorder %s20, 1
    %p216 = por %p214, %p215
    %p218 = scmp.ne.s32.totalorder %s201, %s217
    %p219 = scmp.eq.s32.totalorder %s20, 0
    %p220 = por %p218, %p219
    %p221 = scmp.le.s32.totalorder 1, %s14
    %p222 = scmp.lt.s32.totalorder %s14, 3
    %p223 = pnand %p221, %p222
    %p224 = pneg %p223
    // Predicated region
    $region9: #{tpu_custom_call.1} parent=5 // pred_check
      _
    $region10: #{tpu_custom_call.1} parent=5 // pred_check_branch
      %226 = sbr.rel (%p223) target = $region12
    $region11: #{tpu_custom_call.1} parent=5 // pred_region
      %s227 = ssub.s32 %s14, 1
      // Predicated region
      $region13: #{tpu_custom_call.1} parent=11 // pred_check
        %p228 = pneg %p61
      $region14: #{tpu_custom_call.1} parent=11 // pred_check_branch
        %230 = sbr.rel (%p228) target = $region16
      $region15: #{tpu_custom_call.1} parent=11 // pred_region
        _
      $region16: #{tpu_custom_call.1} parent=11 // pred_fallthru
        _
      // Predicated region
      $region17: #{tpu_custom_call.1} parent=11 // pred_check
        %p231 = pneg %p82
      $region18: #{tpu_custom_call.1} parent=11 // pred_check_branch
        %233 = sbr.rel (%p231) target = $region20
      $region19: #{tpu_custom_call.1} parent=11 // pred_region
        _
      $region20: #{tpu_custom_call.1} parent=11 // pred_fallthru
        _
      // Predicated region
      $region21: #{tpu_custom_call.1} parent=11 // pred_check
        %p234 = pneg %p103
      $region22: #{tpu_custom_call.1} parent=11 // pred_check_branch
        %236 = sbr.rel (%p234) target = $region24
      $region23: #{tpu_custom_call.1} parent=11 // pred_region
        _
      $region24: #{tpu_custom_call.1} parent=11 // pred_fallthru
        _
      // Predicated region
      $region25: #{tpu_custom_call.1} parent=11 // pred_check
        %p237 = pneg %p124
      $region26: #{tpu_custom_call.1} parent=11 // pred_check_branch
        %239 = sbr.rel (%p237) target = $region28
      $region27: #{tpu_custom_call.1} parent=11 // pred_region
        _
      $region28: #{tpu_custom_call.1} parent=11 // pred_fallthru
        _
      // Predicated region
      $region29: #{tpu_custom_call.1} parent=11 // pred_check
        %p240 = pneg %p145
      $region30: #{tpu_custom_call.1} parent=11 // pred_check_branch
        %242 = sbr.rel (%p240) target = $region32
      $region31: #{tpu_custom_call.1} parent=11 // pred_region
        _
      $region32: #{tpu_custom_call.1} parent=11 // pred_fallthru
        _
      // Predicated region
      $region33: #{tpu_custom_call.1} parent=11 // pred_check
        %p243 = pneg %p166
      $region34: #{tpu_custom_call.1} parent=11 // pred_check_branch
        %245 = sbr.rel (%p243) target = $region36
      $region35: #{tpu_custom_call.1} parent=11 // pred_region
        _
      $region36: #{tpu_custom_call.1} parent=11 // pred_fallthru
        _
      // Predicated region
      $region37: #{tpu_custom_call.1} parent=11 // pred_check
        %p246 = pneg %p187
      $region38: #{tpu_custom_call.1} parent=11 // pred_check_branch
        %248 = sbr.rel (%p246) target = $region40
      $region39: #{tpu_custom_call.1} parent=11 // pred_region
        _
      $region40: #{tpu_custom_call.1} parent=11 // pred_fallthru
        _
    $region12: #{tpu_custom_call.1} parent=5 // pred_fallthru
      _
    %p249 = scmp.lt.s32.totalorder %s14, 2
    // Predicated region
    $region41: #{tpu_custom_call.1} parent=5 // pred_check
      %p250 = pneg %p249
    $region42: #{tpu_custom_call.1} parent=5 // pred_check_branch
      %252 = sbr.rel (%p250) target = $region44
    $region43: #{tpu_custom_call.1} parent=5 // pred_region
      // Predicated region
      $region45: #{tpu_custom_call.1} parent=43 // pred_check
        %p253 = pneg %p34
      $region46: #{tpu_custom_call.1} parent=43 // pred_check_branch
        %255 = sbr.rel (%p253) target = $region48
      $region47: #{tpu_custom_call.1} parent=43 // pred_region
        %s256 = smul.u32 16, %s14
        %p257 = scmp.lt.s32.totalorder %s256, 31
        %s258 = scalar_select %p257, %s256, 31
        %s259 = smul.addr %s258, 8
        %s260 = scalar_lea.vmem %s0, %s259
        %s261 = smul.u32 16, %s14
      $region48: #{tpu_custom_call.1} parent=43 // pred_fallthru
        _
    $region44: #{tpu_custom_call.1} parent=5 // pred_fallthru
      _
    %p262 = scmp.le.s32.totalorder 1, %s14
    %p263 = scmp.lt.s32.totalorder %s14, 3
    %p264 = pnand %p262, %p263
    %p265 = pneg %p264
    // Predicated region
    $region49: #{tpu_custom_call.1} parent=5 // pred_check
      _
    $region50: #{tpu_custom_call.1} parent=5 // pred_check_branch
      %267 = sbr.rel (%p264) target = $region52
    $region51: #{tpu_custom_call.1} parent=5 // pred_region
      %s268 = ssub.s32 %s14, 1
      %s269 = smul.u32 16, %s19
      %p270 = scmp.lt.s32.totalorder %s269, 31
      %s271 = scalar_select %p270, %s269, 31
      %s272 = smul.addr %s271, 8
      %s273 = scalar_lea.vmem %s0, %s272
      %p274 = pneg %p40
      %p275 = pneg %p37
      %p276 = pneg %p61
      %p277 = pneg %p58
      %p278 = pneg %p82
      %p279 = pneg %p79
      %p280 = pneg %p103
      %p281 = pneg %p100
      %p282 = pneg %p124
      %p283 = pneg %p121
      %p284 = pneg %p145
      %p285 = pneg %p142
      %p286 = pneg %p166
      %p287 = pneg %p163
      %p288 = pneg %p187
      %p289 = pneg %p184
      %p290 = pneg %p213
      %p291 = pneg %p210
      %s292 = smul.u32 16, %s19
      %p293 = scmp.lt.s32.totalorder %s292, 31
      %s294 = scalar_select %p293, %s292, 31
      %s295 = smul.addr %s294, 8
      %s296 = scalar_lea.vmem %s8, %s295
      %s297 = smul.u32 16, %s19
      %p298 = scmp.lt.s32.totalorder %s297, 31
      %s299 = scalar_select %p298, %s297, 31
      %s300 = smul.addr %s299, 8
      %s301 = scalar_lea.vmem %s0, %s300
      %s302 = smul.u32 16, %s19
      %s303 = smul.u32 16, %s19
      %p304 = scmp.lt.s32.totalorder %s303, 31
      %s305 = scalar_select %p304, %s303, 31
      %s306 = smul.addr %s305, 8
      %s307 = scalar_lea.vmem %s8, %s306
      %s308 = smul.u32 16, %s19
      %v309 = vld [vmem:[%s301] sm:$0xff]
      %v310 = vld [vmem:[%s301 + $0x8] sm:$0xff]
      %v311 = vld [vmem:[%s301 + $0x10] sm:$0xff]
      %v312 = vld [vmem:[%s301 + $0x18] sm:$0xff]
      %v313 = vld [vmem:[%s301 + $0x20] sm:$0xff]
      %v314 = vld [vmem:[%s301 + $0x28] sm:$0xff]
      %v315 = vld [vmem:[%s301 + $0x30] sm:$0xff]
      %v316 = vld [vmem:[%s301 + $0x38] sm:$0xff]
      %v317 = vld [vmem:[%s301 + $0x40] sm:$0xff]
      %v318 = vld [vmem:[%s301 + $0x48] sm:$0xff]
      %v319 = vld [vmem:[%s301 + $0x50] sm:$0xff]
      %v320 = vld [vmem:[%s301 + $0x58] sm:$0xff]
      %v321 = vld [vmem:[%s301 + $0x60] sm:$0xff]
      %v322 = vld [vmem:[%s301 + $0x68] sm:$0xff]
      %v323 = vld [vmem:[%s301 + $0x70] sm:$0xff]
      %v324 = vld [vmem:[%s301 + $0x78] sm:$0xff]
      %v325 = vld [vmem:[%s1] sm:$0xff]
      %v326 = vld [vmem:[%s1 + $0x8] sm:$0xff]
      %v327 = vld [vmem:[%s1 + $0x10] sm:$0xff]
      %v328 = vld [vmem:[%s1 + $0x18] sm:$0xff]
      %v329 = vld [vmem:[%s1 + $0x20] sm:$0xff]
      %v330 = vld [vmem:[%s1 + $0x28] sm:$0xff]
      %v331 = vld [vmem:[%s1 + $0x30] sm:$0xff]
      %v332 = vld [vmem:[%s1 + $0x38] sm:$0xff]
      %v333 = vld [vmem:[%s2] sm:$0xff]
      %v334 = vld [vmem:[%s2 + $0x8] sm:$0xff]
      %v335 = vld [vmem:[%s2 + $0x10] sm:$0xff]
      %v336 = vld [vmem:[%s2 + $0x18] sm:$0xff]
      %v337 = vld [vmem:[%s2 + $0x20] sm:$0xff]
      %v338 = vld [vmem:[%s2 + $0x28] sm:$0xff]
      %v339 = vld [vmem:[%s2 + $0x30] sm:$0xff]
      %v340 = vld [vmem:[%s2 + $0x38] sm:$0xff]
      %342 = vset.pattern.permute.xlu0 0
      %343 = vperm.xlu0 %342, %v333
      %v344 = vpop.permute.xlu0 %343
      %347 = vset.pattern.permute.xlu0 0
      %348 = vperm.xlu0 %347, %v334
      %v349 = vpop.permute.xlu0 %348
      %352 = vset.pattern.permute.xlu0 0
      %353 = vperm.xlu0 %352, %v335
      %v354 = vpop.permute.xlu0 %353
      %357 = vset.pattern.permute.xlu0 0
      %358 = vperm.xlu0 %357, %v336
      %v359 = vpop.permute.xlu0 %358
      %362 = vset.pattern.permute.xlu0 0
      %363 = vperm.xlu0 %362, %v337
      %v364 = vpop.permute.xlu0 %363
      %367 = vset.pattern.permute.xlu0 0
      %368 = vperm.xlu0 %367, %v338
      %v369 = vpop.permute.xlu0 %368
      %372 = vset.pattern.permute.xlu0 0
      %373 = vperm.xlu0 %372, %v339
      %v374 = vpop.permute.xlu0 %373
      %377 = vset.pattern.permute.xlu0 0
      %378 = vperm.xlu0 %377, %v340
      %v379 = vpop.permute.xlu0 %378
      %vm381 = vcmask 130048
      %v383 = vsel %vm381, %v325, 0
      %v386 = vsel %vm381, %v326, 0
      %v389 = vsel %vm381, %v327, 0
      %v392 = vsel %vm381, %v328, 0
      %v395 = vsel %vm381, %v329, 0
      %v398 = vsel %vm381, %v330, 0
      %v401 = vsel %vm381, %v331, 0
      %v404 = vsel %vm381, %v332, 0
      %v407 = vsel %vm381, %v309, 0
      %v410 = vsel %vm381, %v310, 0
      %v413 = vsel %vm381, %v311, 0
      %v416 = vsel %vm381, %v312, 0
      %v419 = vsel %vm381, %v313, 0
      %v422 = vsel %vm381, %v314, 0
      %v425 = vsel %vm381, %v315, 0
      %v428 = vsel %vm381, %v316, 0
      %v431 = vsel %vm381, %v317, 0
      %v434 = vsel %vm381, %v318, 0
      %v437 = vsel %vm381, %v319, 0
      %v440 = vsel %vm381, %v320, 0
      %v443 = vsel %vm381, %v321, 0
      %v446 = vsel %vm381, %v322, 0
      %v449 = vsel %vm381, %v323, 0
      %v452 = vsel %vm381, %v324, 0
      %454 = vmatprep.subr.mxu0 0.0
      %455 = vmatpush1.xpose.msra.mxu0 %v452
      %456 = vmatprep.subr.mxu0 0.0
      %457 = vmatpush1.xpose.msra.mxu0 %v449
      %458 = vmatprep.subr.mxu0 0.0
      %459 = vmatpush1.xpose.msra.mxu0 %v446
      %460 = vmatprep.subr.mxu0 0.0
      %461 = vmatpush1.xpose.msra.mxu0 %v443
      %462 = vmatprep.subr.mxu0 0.0
      %463 = vmatpush1.xpose.msra.mxu0 %v440
      %464 = vmatprep.subr.mxu0 0.0
      %465 = vmatpush1.xpose.msra.mxu0 %v437
      %466 = vmatprep.subr.mxu0 0.0
      %467 = vmatpush1.xpose.msra.mxu0 %v434
      %468 = vmatprep.subr.mxu0 0.0
      %469 = vmatpush1.xpose.msra.mxu0 %v431
      %470 = vmatprep.subr.mxu0 0.0
      %471 = vmatpush1.xpose.msra.mxu0 %v428
      %472 = vmatprep.subr.mxu0 0.0
      %473 = vmatpush1.xpose.msra.mxu0 %v425
      %474 = vmatprep.subr.mxu0 0.0
      %475 = vmatpush1.xpose.msra.mxu0 %v422
      %476 = vmatprep.subr.mxu0 0.0
      %477 = vmatpush1.xpose.msra.mxu0 %v419
      %478 = vmatprep.subr.mxu0 0.0
      %479 = vmatpush1.xpose.msra.mxu0 %v416
      %480 = vmatprep.subr.mxu0 0.0
      %481 = vmatpush1.xpose.msra.mxu0 %v413
      %482 = vmatprep.subr.mxu0 0.0
      %483 = vmatpush1.xpose.msra.mxu0 %v410
      %484 = vmatprep.subr.mxu0 0.0
      %485 = vmatpush1.xpose.msra.mxu0 %v407
      %486 = vmatprep.subr.mxu0 0.0
      %487 = vmatpush2.xpose.msra.mxu0 0.0
      %488 = vmatprep.subr.mxu0 0.0
      %489 = vmatpush2.xpose.msra.mxu0 0.0
      %490 = vmatprep.subr.mxu0 0.0
      %491 = vmatpush2.xpose.msra.mxu0 0.0
      %492 = vmatprep.subr.mxu0 0.0
      %493 = vmatpush2.xpose.msra.mxu0 0.0
      %494 = vmatprep.subr.mxu0 0.0
      %495 = vmatpush2.xpose.msra.mxu0 0.0
      %496 = vmatprep.subr.mxu0 0.0
      %497 = vmatpush2.xpose.msra.mxu0 0.0
      %498 = vmatprep.subr.mxu0 0.0
      %499 = vmatpush2.xpose.msra.mxu0 0.0
      %500 = vmatprep.subr.mxu0 0.0
      %501 = vmatpush2.xpose.msra.mxu0 0.0
      %502 = vmatprep.subr.mxu0 0.0
      %503 = vmatpush2.xpose.msra.mxu0 0.0
      %504 = vmatprep.subr.mxu0 0.0
      %505 = vmatpush2.xpose.msra.mxu0 0.0
      %506 = vmatprep.subr.mxu0 0.0
      %507 = vmatpush2.xpose.msra.mxu0 0.0
      %508 = vmatprep.subr.mxu0 0.0
      %509 = vmatpush2.xpose.msra.mxu0 0.0
      %510 = vmatprep.subr.mxu0 0.0
      %511 = vmatpush2.xpose.msra.mxu0 0.0
      %512 = vmatprep.subr.mxu0 0.0
      %513 = vmatpush2.xpose.msra.mxu0 0.0
      %514 = vmatprep.subr.mxu0 0.0
      %515 = vmatpush2.xpose.msra.mxu0 0.0
      %516 = vmatprep.subr.mxu0 0.0
      %517 = vmatpush2.xpose.msra.mxu0 0.0
      %518 = vmatprep.mubr.f32.mxu0 0.0
      %519 = vmatmul.mubr.f32.gmra.mxu0 %v383
      %v520 = vpop.f32.mrf.mxu0
      %v521 = vadd.f32 %v344, %v520
      %v522 = vpop.f32.mrf.mxu0
      %523 = vmatprep.mubr.f32.mxu0 0.0
      %524 = vmatmul.mubr.f32.gmra.mxu0 %v386
      %v525 = vpop.f32.mrf.mxu0
      %v526 = vadd.f32 %v349, %v525
      %v527 = vpop.f32.mrf.mxu0
      %528 = vmatprep.mubr.f32.mxu0 0.0
      %529 = vmatmul.mubr.f32.gmra.mxu0 %v389
      %v530 = vpop.f32.mrf.mxu0
      %v531 = vadd.f32 %v354, %v530
      %v532 = vpop.f32.mrf.mxu0
      %533 = vmatprep.mubr.f32.mxu0 0.0
      %534 = vmatmul.mubr.f32.gmra.mxu0 %v392
      %v535 = vpop.f32.mrf.mxu0
      %v536 = vadd.f32 %v359, %v535
      %v537 = vpop.f32.mrf.mxu0
      %538 = vmatprep.mubr.f32.mxu0 0.0
      %539 = vmatmul.mubr.f32.gmra.mxu0 %v395
      %v540 = vpop.f32.mrf.mxu0
      %v541 = vadd.f32 %v364, %v540
      %v542 = vpop.f32.mrf.mxu0
      %543 = vmatprep.mubr.f32.mxu0 0.0
      %544 = vmatmul.mubr.f32.gmra.mxu0 %v398
      %v545 = vpop.f32.mrf.mxu0
      %v546 = vadd.f32 %v369, %v545
      %v547 = vpop.f32.mrf.mxu0
      %548 = vmatprep.mubr.f32.mxu0 0.0
      %549 = vmatmul.mubr.f32.gmra.mxu0 %v401
      %v550 = vpop.f32.mrf.mxu0
      %v551 = vadd.f32 %v374, %v550
      %v552 = vpop.f32.mrf.mxu0
      %553 = vmatprep.mubr.f32.mxu0 0.0
      %554 = vmatmul.mubr.f32.gmra.mxu0 %v404
      %v555 = vpop.f32.mrf.mxu0
      %v556 = vadd.f32 %v379, %v555
      %v557 = vpop.f32.mrf.mxu0
      %558 = vdwg.mxu0
      %v559 = vtanh.pop %v521
      %v560 = vtanh.pop %v526
      %v561 = vtanh.pop %v531
      %v562 = vtanh.pop %v536
      %v563 = vtanh.pop %v541
      %v564 = vtanh.pop %v546
      %v565 = vtanh.pop %v551
      %v566 = vtanh.pop %v556
      %v567 = vld [vmem:[%s3] sm:$0xff]
      %v568 = vld [vmem:[%s3 + $0x8] sm:$0xff]
      %v569 = vld [vmem:[%s3 + $0x10] sm:$0xff]
      %v570 = vld [vmem:[%s3 + $0x18] sm:$0xff]
      %v571 = vld [vmem:[%s3 + $0x20] sm:$0xff]
      %v572 = vld [vmem:[%s3 + $0x28] sm:$0xff]
      %v573 = vld [vmem:[%s3 + $0x30] sm:$0xff]
      %v574 = vld [vmem:[%s3 + $0x38] sm:$0xff]
      %v575 = vld [vmem:[%s5] sm:$0xff]
      %v576 = vld [vmem:[%s5 + $0x8] sm:$0xff]
      %v577 = vld [vmem:[%s5 + $0x10] sm:$0xff]
      %v578 = vld [vmem:[%s5 + $0x18] sm:$0xff]
      %v579 = vld [vmem:[%s5 + $0x20] sm:$0xff]
      %v580 = vld [vmem:[%s5 + $0x28] sm:$0xff]
      %v581 = vld [vmem:[%s5 + $0x30] sm:$0xff]
      %v582 = vld [vmem:[%s5 + $0x38] sm:$0xff]
      %584 = vset.pattern.permute.xlu0 0
      %585 = vperm.xlu0 %584, %v575
      %v586 = vpop.permute.xlu0 %585
      %589 = vset.pattern.permute.xlu0 0
      %590 = vperm.xlu0 %589, %v576
      %v591 = vpop.permute.xlu0 %590
      %594 = vset.pattern.permute.xlu0 0
      %595 = vperm.xlu0 %594, %v577
      %v596 = vpop.permute.xlu0 %595
      %599 = vset.pattern.permute.xlu0 0
      %600 = vperm.xlu0 %599, %v578
      %v601 = vpop.permute.xlu0 %600
      %604 = vset.pattern.permute.xlu0 0
      %605 = vperm.xlu0 %604, %v579
      %v606 = vpop.permute.xlu0 %605
      %609 = vset.pattern.permute.xlu0 0
      %610 = vperm.xlu0 %609, %v580
      %v611 = vpop.permute.xlu0 %610
      %614 = vset.pattern.permute.xlu0 0
      %615 = vperm.xlu0 %614, %v581
      %v616 = vpop.permute.xlu0 %615
      %619 = vset.pattern.permute.xlu0 0
      %620 = vperm.xlu0 %619, %v582
      %v621 = vpop.permute.xlu0 %620
      %vm623 = vcmask 523264
      %v625 = vsel %vm623, %v567, 0
      %v628 = vsel %vm623, %v568, 0
      %v631 = vsel %vm623, %v569, 0
      %v634 = vsel %vm623, %v570, 0
      %v637 = vsel %vm623, %v571, 0
      %v640 = vsel %vm623, %v572, 0
      %v643 = vsel %vm623, %v573, 0
      %v646 = vsel %vm623, %v574, 0
      %648 = vmatprep.subr.mxu0 0.0
      %649 = vmatpush1.msra.mxu0 0.0
      %650 = vmatprep.subr.mxu0 0.0
      %651 = vmatpush1.msra.mxu0 0.0
      %652 = vmatprep.subr.mxu0 0.0
      %653 = vmatpush1.msra.mxu0 0.0
      %654 = vmatprep.subr.mxu0 0.0
      %655 = vmatpush1.msra.mxu0 0.0
      %656 = vmatprep.subr.mxu0 0.0
      %657 = vmatpush1.msra.mxu0 0.0
      %658 = vmatprep.subr.mxu0 0.0
      %659 = vmatpush1.msra.mxu0 0.0
      %660 = vmatprep.subr.mxu0 0.0
      %661 = vmatpush1.msra.mxu0 0.0
      %662 = vmatprep.subr.mxu0 0.0
      %663 = vmatpush1.msra.mxu0 0.0
      %664 = vmatprep.subr.mxu0 0.0
      %665 = vmatpush1.msra.mxu0 %v566
      %666 = vmatprep.subr.mxu0 0.0
      %667 = vmatpush1.msra.mxu0 %v565
      %668 = vmatprep.subr.mxu0 0.0
      %669 = vmatpush1.msra.mxu0 %v564
      %670 = vmatprep.subr.mxu0 0.0
      %671 = vmatpush1.msra.mxu0 %v563
      %672 = vmatprep.subr.mxu0 0.0
      %673 = vmatpush1.msra.mxu0 %v562
      %674 = vmatprep.subr.mxu0 0.0
      %675 = vmatpush1.msra.mxu0 %v561
      %676 = vmatprep.subr.mxu0 0.0
      %677 = vmatpush1.msra.mxu0 %v560
      %678 = vmatprep.subr.mxu0 0.0
      %679 = vmatpush1.msra.mxu0 %v559
      %680 = vmatprep.subr.mxu0 0.0
      %681 = vmatpush2.msra.mxu0 0.0
      %682 = vmatprep.subr.mxu0 0.0
      %683 = vmatpush2.msra.mxu0 0.0
      %684 = vmatprep.subr.mxu0 0.0
      %685 = vmatpush2.msra.mxu0 0.0
      %686 = vmatprep.subr.mxu0 0.0
      %687 = vmatpush2.msra.mxu0 0.0
      %688 = vmatprep.subr.mxu0 0.0
      %689 = vmatpush2.msra.mxu0 0.0
      %690 = vmatprep.subr.mxu0 0.0
      %691 = vmatpush2.msra.mxu0 0.0
      %692 = vmatprep.subr.mxu0 0.0
      %693 = vmatpush2.msra.mxu0 0.0
      %694 = vmatprep.subr.mxu0 0.0
      %695 = vmatpush2.msra.mxu0 0.0
      %696 = vmatprep.subr.mxu0 0.0
      %697 = vmatpush2.msra.mxu0 0.0
      %698 = vmatprep.subr.mxu0 0.0
      %699 = vmatpush2.msra.mxu0 0.0
      %700 = vmatprep.subr.mxu0 0.0
      %701 = vmatpush2.msra.mxu0 0.0
      %702 = vmatprep.subr.mxu0 0.0
      %703 = vmatpush2.msra.mxu0 0.0
      %704 = vmatprep.subr.mxu0 0.0
      %705 = vmatpush2.msra.mxu0 0.0
      %706 = vmatprep.subr.mxu0 0.0
      %707 = vmatpush2.msra.mxu0 0.0
      %708 = vmatprep.subr.mxu0 0.0
      %709 = vmatpush2.msra.mxu0 0.0
      %710 = vmatprep.subr.mxu0 0.0
      %711 = vmatpush2.msra.mxu0 0.0
      %712 = vmatprep.mubr.f32.mxu0 0.0
      %713 = vmatmul.mubr.f32.gmra.mxu0 %v625
      %v714 = vpop.f32.mrf.mxu0
      %v715 = vadd.f32 %v586, %v714
      %v716 = vpop.f32.mrf.mxu0
      %717 = vmatprep.mubr.f32.mxu0 0.0
      %718 = vmatmul.mubr.f32.gmra.mxu0 %v628
      %v719 = vpop.f32.mrf.mxu0
      %v720 = vadd.f32 %v591, %v719
      %v721 = vpop.f32.mrf.mxu0
      %722 = vmatprep.mubr.f32.mxu0 0.0
      %723 = vmatmul.mubr.f32.gmra.mxu0 %v631
      %v724 = vpop.f32.mrf.mxu0
      %v725 = vadd.f32 %v596, %v724
      %v726 = vpop.f32.mrf.mxu0
      %727 = vmatprep.mubr.f32.mxu0 0.0
      %728 = vmatmul.mubr.f32.gmra.mxu0 %v634
      %v729 = vpop.f32.mrf.mxu0
      %v730 = vadd.f32 %v601, %v729
      %v731 = vpop.f32.mrf.mxu0
      %732 = vmatprep.mubr.f32.mxu0 0.0
      %733 = vmatmul.mubr.f32.gmra.mxu0 %v637
      %v734 = vpop.f32.mrf.mxu0
      %v735 = vadd.f32 %v606, %v734
      %v736 = vpop.f32.mrf.mxu0
      %737 = vmatprep.mubr.f32.mxu0 0.0
      %738 = vmatmul.mubr.f32.gmra.mxu0 %v640
      %v739 = vpop.f32.mrf.mxu0
      %v740 = vadd.f32 %v611, %v739
      %v741 = vpop.f32.mrf.mxu0
      %742 = vmatprep.mubr.f32.mxu0 0.0
      %743 = vmatmul.mubr.f32.gmra.mxu0 %v643
      %v744 = vpop.f32.mrf.mxu0
      %v745 = vadd.f32 %v616, %v744
      %v746 = vpop.f32.mrf.mxu0
      %747 = vmatprep.mubr.f32.mxu0 0.0
      %748 = vmatmul.mubr.f32.gmra.mxu0 %v646
      %v749 = vpop.f32.mrf.mxu0
      %v750 = vadd.f32 %v621, %v749
      %v751 = vpop.f32.mrf.mxu0
      %752 = vdwg.mxu0
      %v753 = vtanh.pop %v715
      %v754 = vtanh.pop %v720
      %v755 = vtanh.pop %v725
      %v756 = vtanh.pop %v730
      %v757 = vtanh.pop %v735
      %v758 = vtanh.pop %v740
      %v759 = vtanh.pop %v745
      %v760 = vtanh.pop %v750
      %v761 = vld [vmem:[%s6] sm:$0xff]
      %v762 = vld [vmem:[%s6 + $0x8] sm:$0xff]
      %v763 = vld [vmem:[%s6 + $0x10] sm:$0xff]
      %v764 = vld [vmem:[%s6 + $0x18] sm:$0xff]
      %v765 = vld [vmem:[%s6 + $0x20] sm:$0xff]
      %v766 = vld [vmem:[%s6 + $0x28] sm:$0xff]
      %v767 = vld [vmem:[%s6 + $0x30] sm:$0xff]
      %v768 = vld [vmem:[%s6 + $0x38] sm:$0xff]
      %v769 = vmul.f32 %v753, %v753
      %v770 = vmul.f32 %v754, %v754
      %v771 = vmul.f32 %v755, %v755
      %v772 = vmul.f32 %v756, %v756
      %v773 = vmul.f32 %v757, %v757
      %v774 = vmul.f32 %v758, %v758
      %v775 = vmul.f32 %v759, %v759
      %v776 = vmul.f32 %v760, %v760
      %v777 = vsub.f32 1.0, %v769
      %v778 = vsub.f32 1.0, %v770
      %v779 = vsub.f32 1.0, %v771
      %v780 = vsub.f32 1.0, %v772
      %v781 = vsub.f32 1.0, %v773
      %v782 = vsub.f32 1.0, %v774
      %v783 = vsub.f32 1.0, %v775
      %v784 = vsub.f32 1.0, %v776
      %786 = vset.pattern.permute.xlu0 0
      %787 = vperm.xlu0 %786, %v761
      %v788 = vpop.permute.xlu0 %787
      %791 = vset.pattern.permute.xlu0 0
      %792 = vperm.xlu0 %791, %v762
      %v793 = vpop.permute.xlu0 %792
      %796 = vset.pattern.permute.xlu0 0
      %797 = vperm.xlu0 %796, %v763
      %v798 = vpop.permute.xlu0 %797
      %801 = vset.pattern.permute.xlu0 0
      %802 = vperm.xlu0 %801, %v764
      %v803 = vpop.permute.xlu0 %802
      %806 = vset.pattern.permute.xlu0 0
      %807 = vperm.xlu0 %806, %v765
      %v808 = vpop.permute.xlu0 %807
      %811 = vset.pattern.permute.xlu0 0
      %812 = vperm.xlu0 %811, %v766
      %v813 = vpop.permute.xlu0 %812
      %816 = vset.pattern.permute.xlu0 0
      %817 = vperm.xlu0 %816, %v767
      %v818 = vpop.permute.xlu0 %817
      %821 = vset.pattern.permute.xlu0 0
      %822 = vperm.xlu0 %821, %v768
      %v823 = vpop.permute.xlu0 %822
      %v825 = vmul.f32 %v788, %v777
      %v826 = vmul.f32 %v793, %v778
      %v827 = vmul.f32 %v798, %v779
      %v828 = vmul.f32 %v803, %v780
      %v829 = vmul.f32 %v808, %v781
      %v830 = vmul.f32 %v813, %v782
      %v831 = vmul.f32 %v818, %v783
      %v832 = vmul.f32 %v823, %v784
      %v833 = vld [vmem:[%s4] sm:$0xff]
      %v834 = vld [vmem:[%s4 + $0x8] sm:$0xff]
      %v835 = vld [vmem:[%s4 + $0x10] sm:$0xff]
      %v836 = vld [vmem:[%s4 + $0x18] sm:$0xff]
      %v837 = vld [vmem:[%s4 + $0x20] sm:$0xff]
      %v838 = vld [vmem:[%s4 + $0x28] sm:$0xff]
      %v839 = vld [vmem:[%s4 + $0x30] sm:$0xff]
      %v840 = vld [vmem:[%s4 + $0x38] sm:$0xff]
      %v842 = vsel %vm623, %v833, 0
      %v845 = vsel %vm623, %v834, 0
      %v848 = vsel %vm623, %v835, 0
      %v851 = vsel %vm623, %v836, 0
      %v854 = vsel %vm623, %v837, 0
      %v857 = vsel %vm623, %v838, 0
      %v860 = vsel %vm623, %v839, 0
      %v863 = vsel %vm623, %v840, 0
      %865 = vmatprep.subr.mxu0 0.0
      %866 = vmatpush1.msra.mxu0 0.0
      %867 = vmatprep.subr.mxu0 0.0
      %868 = vmatpush1.msra.mxu0 0.0
      %869 = vmatprep.subr.mxu0 0.0
      %870 = vmatpush1.msra.mxu0 0.0
      %871 = vmatprep.subr.mxu0 0.0
      %872 = vmatpush1.msra.mxu0 0.0
      %873 = vmatprep.subr.mxu0 0.0
      %874 = vmatpush1.msra.mxu0 0.0
      %875 = vmatprep.subr.mxu0 0.0
      %876 = vmatpush1.msra.mxu0 0.0
      %877 = vmatprep.subr.mxu0 0.0
      %878 = vmatpush1.msra.mxu0 0.0
      %879 = vmatprep.subr.mxu0 0.0
      %880 = vmatpush1.msra.mxu0 0.0
      %881 = vmatprep.subr.mxu0 0.0
      %882 = vmatpush1.msra.mxu0 %v832
      %883 = vmatprep.subr.mxu0 0.0
      %884 = vmatpush1.msra.mxu0 %v831
      %885 = vmatprep.subr.mxu0 0.0
      %886 = vmatpush1.msra.mxu0 %v830
      %887 = vmatprep.subr.mxu0 0.0
      %888 = vmatpush1.msra.mxu0 %v829
      %889 = vmatprep.subr.mxu0 0.0
      %890 = vmatpush1.msra.mxu0 %v828
      %891 = vmatprep.subr.mxu0 0.0
      %892 = vmatpush1.msra.mxu0 %v827
      %893 = vmatprep.subr.mxu0 0.0
      %894 = vmatpush1.msra.mxu0 %v826
      %895 = vmatprep.subr.mxu0 0.0
      %896 = vmatpush1.msra.mxu0 %v825
      %897 = vmatprep.subr.mxu0 0.0
      %898 = vmatpush2.msra.mxu0 0.0
      %899 = vmatprep.subr.mxu0 0.0
      %900 = vmatpush2.msra.mxu0 0.0
      %901 = vmatprep.subr.mxu0 0.0
      %902 = vmatpush2.msra.mxu0 0.0
      %903 = vmatprep.subr.mxu0 0.0
      %904 = vmatpush2.msra.mxu0 0.0
      %905 = vmatprep.subr.mxu0 0.0
      %906 = vmatpush2.msra.mxu0 0.0
      %907 = vmatprep.subr.mxu0 0.0
      %908 = vmatpush2.msra.mxu0 0.0
      %909 = vmatprep.subr.mxu0 0.0
      %910 = vmatpush2.msra.mxu0 0.0
      %911 = vmatprep.subr.mxu0 0.0
      %912 = vmatpush2.msra.mxu0 0.0
      %913 = vmatprep.subr.mxu0 0.0
      %914 = vmatpush2.msra.mxu0 0.0
      %915 = vmatprep.subr.mxu0 0.0
      %916 = vmatpush2.msra.mxu0 0.0
      %917 = vmatprep.subr.mxu0 0.0
      %918 = vmatpush2.msra.mxu0 0.0
      %919 = vmatprep.subr.mxu0 0.0
      %920 = vmatpush2.msra.mxu0 0.0
      %921 = vmatprep.subr.mxu0 0.0
      %922 = vmatpush2.msra.mxu0 0.0
      %923 = vmatprep.subr.mxu0 0.0
      %924 = vmatpush2.msra.mxu0 0.0
      %925 = vmatprep.subr.mxu0 0.0
      %926 = vmatpush2.msra.mxu0 0.0
      %927 = vmatprep.subr.mxu0 0.0
      %928 = vmatpush2.msra.mxu0 0.0
      %929 = vmatprep.mubr.f32.mxu0 0.0
      %930 = vmatmul.mubr.f32.gmra.mxu0 %v842
      %v931 = vpop.f32.mrf.mxu0
      %v932 = vadd.f32 0.0, %v931
      %v933 = vpop.f32.mrf.mxu0
      %934 = vmatprep.mubr.f32.mxu0 0.0
      %935 = vmatmul.mubr.f32.gmra.mxu0 %v845
      %v936 = vpop.f32.mrf.mxu0
      %v937 = vadd.f32 0.0, %v936
      %v938 = vpop.f32.mrf.mxu0
      %939 = vmatprep.mubr.f32.mxu0 0.0
      %940 = vmatmul.mubr.f32.gmra.mxu0 %v848
      %v941 = vpop.f32.mrf.mxu0
      %v942 = vadd.f32 0.0, %v941
      %v943 = vpop.f32.mrf.mxu0
      %944 = vmatprep.mubr.f32.mxu0 0.0
      %945 = vmatmul.mubr.f32.gmra.mxu0 %v851
      %v946 = vpop.f32.mrf.mxu0
      %v947 = vadd.f32 0.0, %v946
      %v948 = vpop.f32.mrf.mxu0
      %949 = vmatprep.mubr.f32.mxu0 0.0
      %950 = vmatmul.mubr.f32.gmra.mxu0 %v854
      %v951 = vpop.f32.mrf.mxu0
      %v952 = vadd.f32 0.0, %v951
      %v953 = vpop.f32.mrf.mxu0
      %954 = vmatprep.mubr.f32.mxu0 0.0
      %955 = vmatmul.mubr.f32.gmra.mxu0 %v857
      %v956 = vpop.f32.mrf.mxu0
      %v957 = vadd.f32 0.0, %v956
      %v958 = vpop.f32.mrf.mxu0
      %959 = vmatprep.mubr.f32.mxu0 0.0
      %960 = vmatmul.mubr.f32.gmra.mxu0 %v860
      %v961 = vpop.f32.mrf.mxu0
      %v962 = vadd.f32 0.0, %v961
      %v963 = vpop.f32.mrf.mxu0
      %964 = vmatprep.mubr.f32.mxu0 0.0
      %965 = vmatmul.mubr.f32.gmra.mxu0 %v863
      %v966 = vpop.f32.mrf.mxu0
      %v967 = vadd.f32 0.0, %v966
      %v968 = vpop.f32.mrf.mxu0
      %969 = vdwg.mxu0
      %v970 = vadd.f32 %v788, %v932
      %v971 = vadd.f32 %v793, %v937
      %v972 = vadd.f32 %v798, %v942
      %v973 = vadd.f32 %v803, %v947
      %v974 = vadd.f32 %v808, %v952
      %v975 = vadd.f32 %v813, %v957
      %v976 = vadd.f32 %v818, %v962
      %v977 = vadd.f32 %v823, %v967
      %v978 = vmul.f32 %v559, %v559
      %v979 = vmul.f32 %v560, %v560
      %v980 = vmul.f32 %v561, %v561
      %v981 = vmul.f32 %v562, %v562
      %v982 = vmul.f32 %v563, %v563
      %v983 = vmul.f32 %v564, %v564
      %v984 = vmul.f32 %v565, %v565
      %v985 = vmul.f32 %v566, %v566
      %v986 = vsub.f32 1.0, %v978
      %v987 = vsub.f32 1.0, %v979
      %v988 = vsub.f32 1.0, %v980
      %v989 = vsub.f32 1.0, %v981
      %v990 = vsub.f32 1.0, %v982
      %v991 = vsub.f32 1.0, %v983
      %v992 = vsub.f32 1.0, %v984
      %v993 = vsub.f32 1.0, %v985
      %v994 = vmul.f32 %v970, %v986
      %v995 = vmul.f32 %v971, %v987
      %v996 = vmul.f32 %v972, %v988
      %v997 = vmul.f32 %v973, %v989
      %v998 = vmul.f32 %v974, %v990
      %v999 = vmul.f32 %v975, %v991
      %v1000 = vmul.f32 %v976, %v992
      %v1001 = vmul.f32 %v977, %v993
      %v1002 = vld [vmem:[%s7] sm:$0xff]
      %v1003 = vld [vmem:[%s7 + $0x8] sm:$0xff]
      %v1005 = vsel %vm623, %v1002, 0
      %v1008 = vsel %vm623, %v1003, 0
      %1010 = vmatprep.subr.mxu0 0.0
      %1011 = vmatpush1.msra.mxu0 0.0
      %1012 = vmatprep.subr.mxu0 0.0
      %1013 = vmatpush1.msra.mxu0 0.0
      %1014 = vmatprep.subr.mxu0 0.0
      %1015 = vmatpush1.msra.mxu0 0.0
      %1016 = vmatprep.subr.mxu0 0.0
      %1017 = vmatpush1.msra.mxu0 0.0
      %1018 = vmatprep.subr.mxu0 0.0
      %1019 = vmatpush1.msra.mxu0 0.0
      %1020 = vmatprep.subr.mxu0 0.0
      %1021 = vmatpush1.msra.mxu0 0.0
      %1022 = vmatprep.subr.mxu0 0.0
      %1023 = vmatpush1.msra.mxu0 0.0
      %1024 = vmatprep.subr.mxu0 0.0
      %1025 = vmatpush1.msra.mxu0 0.0
      %1026 = vmatprep.subr.mxu0 0.0
      %1027 = vmatpush1.msra.mxu0 %v1001
      %1028 = vmatprep.subr.mxu0 0.0
      %1029 = vmatpush1.msra.mxu0 %v1000
      %1030 = vmatprep.subr.mxu0 0.0
      %1031 = vmatpush1.msra.mxu0 %v999
      %1032 = vmatprep.subr.mxu0 0.0
      %1033 = vmatpush1.msra.mxu0 %v998
      %1034 = vmatprep.subr.mxu0 0.0
      %1035 = vmatpush1.msra.mxu0 %v997
      %1036 = vmatprep.subr.mxu0 0.0
      %1037 = vmatpush1.msra.mxu0 %v996
      %1038 = vmatprep.subr.mxu0 0.0
      %1039 = vmatpush1.msra.mxu0 %v995
      %1040 = vmatprep.subr.mxu0 0.0
      %1041 = vmatpush1.msra.mxu0 %v994
      %1042 = vmatprep.subr.mxu0 0.0
      %1043 = vmatpush2.msra.mxu0 0.0
      %1044 = vmatprep.subr.mxu0 0.0
      %1045 = vmatpush2.msra.mxu0 0.0
      %1046 = vmatprep.subr.mxu0 0.0
      %1047 = vmatpush2.msra.mxu0 0.0
      %1048 = vmatprep.subr.mxu0 0.0
      %1049 = vmatpush2.msra.mxu0 0.0
      %1050 = vmatprep.subr.mxu0 0.0
      %1051 = vmatpush2.msra.mxu0 0.0
      %1052 = vmatprep.subr.mxu0 0.0
      %1053 = vmatpush2.msra.mxu0 0.0
      %1054 = vmatprep.subr.mxu0 0.0
      %1055 = vmatpush2.msra.mxu0 0.0
      %1056 = vmatprep.subr.mxu0 0.0
      %1057 = vmatpush2.msra.mxu0 0.0
      %1058 = vmatprep.subr.mxu0 0.0
      %1059 = vmatpush2.msra.mxu0 0.0
      %1060 = vmatprep.subr.mxu0 0.0
      %1061 = vmatpush2.msra.mxu0 0.0
      %1062 = vmatprep.subr.mxu0 0.0
      %1063 = vmatpush2.msra.mxu0 0.0
      %1064 = vmatprep.subr.mxu0 0.0
      %1065 = vmatpush2.msra.mxu0 0.0
      %1066 = vmatprep.subr.mxu0 0.0
      %1067 = vmatpush2.msra.mxu0 0.0
      %1068 = vmatprep.subr.mxu0 0.0
      %1069 = vmatpush2.msra.mxu0 0.0
      %1070 = vmatprep.subr.mxu0 0.0
      %1071 = vmatpush2.msra.mxu0 0.0
      %1072 = vmatprep.subr.mxu0 0.0
      %1073 = vmatpush2.msra.mxu0 0.0
      %1074 = vmatprep.mubr.f32.mxu0 0.0
      %1075 = vmatmul.mubr.f32.gmra.mxu0 %v1005
      %v1076 = vpop.f32.mrf.mxu0
      %v1077 = vadd.f32 0.0, %v1076
      %v1078 = vpop.f32.mrf.mxu0
      %1079 = vmatprep.mubr.f32.mxu0 0.0
      %1080 = vmatmul.mubr.f32.gmra.mxu0 %v1008
      %v1081 = vpop.f32.mrf.mxu0
      %v1082 = vadd.f32 0.0, %v1081
      %v1083 = vpop.f32.mrf.mxu0
      %1084 = vdwg.mxu0
      %1085 = vxpose.xlu0.b32.start [1/16] %v1077, 128
      %1086 = vxpose.xlu0.b32.cont [2/16] %v1082, 128
      %1087 = vxpose.xlu0.b32.cont [3/16] 0.0, 128
      %1088 = vxpose.xlu0.b32.cont [4/16] 0.0, 128
      %1089 = vxpose.xlu0.b32.cont [5/16] 0.0, 128
      %1090 = vxpose.xlu0.b32.cont [6/16] 0.0, 128
      %1091 = vxpose.xlu0.b32.cont [7/16] 0.0, 128
      %1092 = vxpose.xlu0.b32.cont [8/16] 0.0, 128
      %1093 = vxpose.xlu0.b32.cont [9/16] 0.0, 128
      %1094 = vxpose.xlu0.b32.cont [10/16] 0.0, 128
      %1095 = vxpose.xlu0.b32.cont [11/16] 0.0, 128
      %1096 = vxpose.xlu0.b32.cont [12/16] 0.0, 128
      %1097 = vxpose.xlu0.b32.cont [13/16] 0.0, 128
      %1098 = vxpose.xlu0.b32.cont [14/16] 0.0, 128
      %1099 = vxpose.xlu0.b32.cont [15/16] 0.0, 128
      %1100 = vxpose.xlu0.b32.end [16/16] 0.0, 128
      %v1101 = vpop.trf.xlu0
      %v1102 = vpop.trf.xlu0
      %v1103 = vpop.trf.xlu0
      %v1104 = vpop.trf.xlu0
      %v1105 = vpop.trf.xlu0
      %v1106 = vpop.trf.xlu0
      %v1107 = vpop.trf.xlu0
      %v1108 = vpop.trf.xlu0
      %v1109 = vpop.trf.xlu0
      %v1110 = vpop.trf.xlu0
      %v1111 = vpop.trf.xlu0
      %v1112 = vpop.trf.xlu0
      %v1113 = vpop.trf.xlu0
      %v1114 = vpop.trf.xlu0
      %v1115 = vpop.trf.xlu0
      %v1116 = vpop.trf.xlu0
      %1117 = vst.msk [vmem:[%s307] sm:$0xff] %vm381, %v1101
      %1118 = vst.msk [vmem:[%s307 + $0x8] sm:$0xff] %vm381, %v1102
      %1119 = vst.msk [vmem:[%s307 + $0x10] sm:$0xff] %vm381, %v1103
      %1120 = vst.msk [vmem:[%s307 + $0x18] sm:$0xff] %vm381, %v1104
      %1121 = vst.msk [vmem:[%s307 + $0x20] sm:$0xff] %vm381, %v1105
      %1122 = vst.msk [vmem:[%s307 + $0x28] sm:$0xff] %vm381, %v1106
      %1123 = vst.msk [vmem:[%s307 + $0x30] sm:$0xff] %vm381, %v1107
      %1124 = vst.msk [vmem:[%s307 + $0x38] sm:$0xff] %vm381, %v1108
      %1125 = vst.msk [vmem:[%s307 + $0x40] sm:$0xff] %vm381, %v1109
      %1126 = vst.msk [vmem:[%s307 + $0x48] sm:$0xff] %vm381, %v1110
      %1127 = vst.msk [vmem:[%s307 + $0x50] sm:$0xff] %vm381, %v1111
      %1128 = vst.msk [vmem:[%s307 + $0x58] sm:$0xff] %vm381, %v1112
      %1129 = vst.msk [vmem:[%s307 + $0x60] sm:$0xff] %vm381, %v1113
      %1130 = vst.msk [vmem:[%s307 + $0x68] sm:$0xff] %vm381, %v1114
      %1131 = vst.msk [vmem:[%s307 + $0x70] sm:$0xff] %vm381, %v1115
      %1132 = vst.msk [vmem:[%s307 + $0x78] sm:$0xff] %vm381, %v1116
      %s1133 = smul.u32 16, %s19
      %p1134 = scmp.lt.s32.totalorder %s1133, 31
      %s1135 = scalar_select %p1134, %s1133, 31
      %s1136 = smul.addr %s1135, 8
      %s1137 = scalar_lea.vmem %s8, %s1136
      // Predicated region
      $region53: #{tpu_custom_call.1} parent=51 // pred_check
        %p1138 = pneg %p210
      $region54: #{tpu_custom_call.1} parent=51 // pred_check_branch
        %1140 = sbr.rel (%p1138) target = $region56
      $region55: #{tpu_custom_call.1} parent=51 // pred_region
        %s1141 = smul.u32 16, %s19
      $region56: #{tpu_custom_call.1} parent=51 // pred_fallthru
        _
    $region52: #{tpu_custom_call.1} parent=5 // pred_fallthru
      _
    %p1142 = scmp.le.s32.totalorder 2, %s14
    // Predicated region
    $region57: #{tpu_custom_call.1} parent=5 // pred_check
      %p1143 = pneg %p1142
    $region58: #{tpu_custom_call.1} parent=5 // pred_check_branch
      %1145 = sbr.rel (%p1143) target = $region60
    $region59: #{tpu_custom_call.1} parent=5 // pred_region
      %s1146 = ssub.s32 %s14, 2
      // Predicated region
      $region61: #{tpu_custom_call.1} parent=59 // pred_check
        %p1147 = pneg %p216
      $region62: #{tpu_custom_call.1} parent=59 // pred_check_branch
        %1149 = sbr.rel (%p1147) target = $region64
      $region63: #{tpu_custom_call.1} parent=59 // pred_region
        %s1150 = smul.u32 16, %s20
        %p1151 = scmp.lt.s32.totalorder %s1150, 31
        %s1152 = scalar_select %p1151, %s1150, 31
        %s1153 = smul.addr %s1152, 8
        %s1154 = scalar_lea.vmem %s8, %s1153
      $region64: #{tpu_custom_call.1} parent=59 // pred_fallthru
        _
    $region60: #{tpu_custom_call.1} parent=5 // pred_fallthru
      _
  $region6: #{tpu_custom_call.1} parent=0 // loop_footer
    %s18 = sadd.s32 1, %s14
  $region7: #{tpu_custom_call.1} parent=0 // loop_footer_branch
    %13 = sbr.rel target = $region3
  $region8: #{tpu_custom_call.1} parent=0 // loop_exit
    _

</llo_original>
